<compile_context>
chip_gen: v6e
topology: v6e:2x2x1
jax: 0.10.0
libtpu: 0.0.40
codegen_flags: <defaults>
</compile_context>

<pallas_src>
import functools

import jax
import jax.numpy as jnp
from jax.experimental import pallas as pl
from jax.experimental.pallas import tpu as pltpu


_MAX_COLS = 16384  # column-tile cap for the plain add path (multiple of 128)


# ---------------------------------------------------------------------------
# Per-generation VMEM constants (review: exploit v5e/v6e's 128 MiB VMEM)
# ---------------------------------------------------------------------------
@functools.lru_cache(maxsize=1)
def _gen_constants():
    vmem = 64 * 1024 * 1024
    try:
        info = pltpu.get_tpu_info()
        vmem = int(getattr(info, "vmem_capacity_bytes", vmem))
    except Exception:
        pass
    if vmem >= 100 * 1024 * 1024:   # v5e / v6e: 128 MiB VMEM
        return {"step_bytes": 24 << 20, "vmem_limit": 100 << 20, "s_max": 24 << 20}
    # v7x (64 MiB VMEM) or unknown: conservative
    return {"step_bytes": 12 << 20, "vmem_limit": 48 << 20, "s_max": 8 << 20}


def _sublane(dtype):
    # sublane pack: 8 for 4-byte, 16 for 2-byte, 32 for 1-byte dtypes
    return max(8, 32 // jnp.dtype(dtype).itemsize)


def _round_up(x, m):
    return -(-x // m) * m


def _pick_row_tile(n_rows, row_bytes, sublane, step_bytes, target_steps=4):
    """Rows per grid step.

    Constraints (perf review):
      * all per-step slabs together stay under `step_bytes`,
      * multiple of the dtype's sublane pack,
      * >= `target_steps` grid steps whenever the row count allows, so the
        software pipeline overlaps DMA with compute and both v7x TensorCores
        get blocks (a 1-step grid disables pipelining entirely).
    """
    n_rows = int(n_rows)
    if n_rows <= sublane:
        return max(n_rows, 1)
    budget = max(sublane, (step_bytes // max(row_bytes, 1)) // sublane * sublane)
    pipeline_cap = max(sublane, _round_up(-(-n_rows // target_steps), sublane))
    return int(min(budget, pipeline_cap))


def _resident_spec(shape):
    """BlockSpec for an operand that stays resident in VMEM for the whole grid.
    Single-buffered: a constant index_map never re-fetches, so double buffering
    would only waste VMEM (review item)."""
    index_map = lambda *_: (0,) * len(shape)
    try:
        return pl.BlockSpec(shape, index_map, pipeline_mode=pl.Buffered(1))
    except TypeError:  # older jax without the pipeline_mode kwarg
        return pl.BlockSpec(shape, index_map)


# ---------------------------------------------------------------------------
# Kernels
# ---------------------------------------------------------------------------
def _add_kernel(a_ref, b_ref, o_ref):
    # identity-shape merge: add in the native input dtype (exact for nearest merge)
    o_ref[...] = a_ref[...] + b_ref[...]


def _resize_add_kernel(s_ref, b_ref, a_ref, o_ref):
    # b (TR, Hi*Wi) @ S (Hi*Wi, Ht*Wt) -> nearest-resized b (exact one-hot select), add a.
    r = jnp.dot(b_ref[...], s_ref[...], preferred_element_type=jnp.float32)
    o_ref[...] = (a_ref[...].astype(jnp.float32) + r).astype(o_ref.dtype)


def _resize_kernel(s_ref, b_ref, o_ref):
    r = jnp.dot(b_ref[...], s_ref[...], preferred_element_type=jnp.float32)
    o_ref[...] = r.astype(o_ref.dtype)


def _make_dense_merge_kernel(resized_half):
    """Fused dense merge: grid axis 2 selects which channel-half of the output
    this step writes — the passthrough copy or the selector-matmul resize.
    Input blocks do not depend on that axis, so Pallas fetches them once per
    (n, channel-block) and reuses them for both halves."""
    def kernel(s_ref, tgt_ref, src_ref, o_ref):
        h = pl.program_id(2)

        @pl.when(h == resized_half)
        def _():
            r = jnp.dot(src_ref[...], s_ref[...], preferred_element_type=jnp.float32)
            o_ref[...] = r.astype(o_ref.dtype)

        @pl.when(h != resized_half)
        def _():
            o_ref[...] = tgt_ref[...].astype(o_ref.dtype)

    return kernel


# ---------------------------------------------------------------------------
# Helpers
# ---------------------------------------------------------------------------
def _selection_matrix(hi, wi, ht, wt, dtype):
    """One-hot S with S[sh*wi+sw, th*wt+tw] = 1 iff (sh, sw) = (floor(th*hi/ht), floor(tw*wi/wt))."""
    rows = (jnp.arange(ht, dtype=jnp.int32) * hi) // ht           # (ht,)
    cols = (jnp.arange(wt, dtype=jnp.int32) * wi) // wt           # (wt,)
    flat_src = (rows[:, None] * wi + cols[None, :]).reshape(-1)   # (ht*wt,)
    src = jnp.arange(hi * wi, dtype=jnp.int32)
    return (src[:, None] == flat_src[None, :]).astype(dtype)      # (hi*wi, ht*wt)


def _jax_nearest(src, th, tw):
    """Plain-JAX nearest resize (PyTorch floor(i*in/out) rule) — fallback/reference."""
    hi, wi = src.shape[-2:]
    rows = (jnp.arange(th) * hi) // th
    cols = (jnp.arange(tw) * wi) // tw
    return src[..., rows[:, None], cols[None, :]]


# ---------------------------------------------------------------------------
# pallas_call wrappers
# ---------------------------------------------------------------------------
def _pallas_add(a2, b2):
    """Elementwise add of two (NC, HW) slabs (identity / no-resize path)."""
    nc, hw = a2.shape
    g = _gen_constants()
    itemsize = jnp.dtype(a2.dtype).itemsize
    tc = hw if hw <= _MAX_COLS else _MAX_COLS
    tr = _pick_row_tile(nc, 3 * tc * itemsize, _sublane(a2.dtype), g["step_bytes"])
    spec = pl.BlockSpec((tr, tc), lambda i, j: (i, j))
    nbytes = nc * hw * itemsize
    return pl.pallas_call(
        _add_kernel,
        out_shape=jax.ShapeDtypeStruct((nc, hw), a2.dtype),
        grid=(pl.cdiv(nc, tr), pl.cdiv(hw, tc)),
        in_specs=[spec, spec],
        out_specs=spec,
        compiler_params=pltpu.CompilerParams(
            dimension_semantics=("parallel", "parallel"),
            vmem_limit_bytes=g["vmem_limit"]),
        cost_estimate=pl.CostEstimate(
            flops=nc * hw, transcendentals=0, bytes_accessed=3 * nbytes),
    )(a2, b2)


def _pallas_resize_add(a, b, ht, wt):
    """out = a + nearest_resize(b, (ht, wt)); a is (N,C,ht,wt), b is (N,C,hi,wi)."""
    n, c = a.shape[:2]
    hi, wi = b.shape[-2:]
    nc = n * c
    a2 = a.reshape(nc, ht * wt)
    b2 = b.reshape(nc, hi * wi)
    s = _selection_matrix(hi, wi, ht, wt, b2.dtype)
    g = _gen_constants()
    itemsize = jnp.dtype(a.dtype).itemsize
    # Budget ALL per-step slabs: b (hi*wi) + a (ht*wt) + out (ht*wt)  (review item)
    row_bytes = (hi * wi + 2 * ht * wt) * itemsize
    tr = _pick_row_tile(nc, row_bytes, _sublane(a.dtype), g["step_bytes"])
    bytes_accessed = (a2.size + b2.size + s.size + nc * ht * wt) * itemsize
    # TODO(synk): when ht*wt < 128 (strong downsample) the output stores are masked
    # partial stores; the output is the smallest tensor here so the cost is minor.
    out2 = pl.pallas_call(
        _resize_add_kernel,
        out_shape=jax.ShapeDtypeStruct((nc, ht * wt), a.dtype),
        grid=(pl.cdiv(nc, tr),),
        in_specs=[
            _resident_spec((hi * wi, ht * wt)),               # selector: resident, 1-buffered
            pl.BlockSpec((tr, hi * wi), lambda i: (i, 0)),    # source slab (to resize)
            pl.BlockSpec((tr, ht * wt), lambda i: (i, 0)),    # target slab (to add)
        ],
        out_specs=pl.BlockSpec((tr, ht * wt), lambda i: (i, 0)),
        compiler_params=pltpu.CompilerParams(
            dimension_semantics=("parallel",),
            vmem_limit_bytes=g["vmem_limit"]),
        cost_estimate=pl.CostEstimate(
            flops=2 * nc * hi * wi * ht * wt + nc * ht * wt,
            transcendentals=0,
            bytes_accessed=bytes_accessed),
    )(s, b2, a2)
    return out2.reshape(n, c, ht, wt)


def _pallas_resize(b, ht, wt):
    """nearest_resize(b, (ht, wt)); b is (N,C,hi,wi)."""
    n, c, hi, wi = b.shape
    nc = n * c
    b2 = b.reshape(nc, hi * wi)
    s = _selection_matrix(hi, wi, ht, wt, b2.dtype)
    g = _gen_constants()
    itemsize = jnp.dtype(b.dtype).itemsize
    row_bytes = (hi * wi + ht * wt) * itemsize
    tr = _pick_row_tile(nc, row_bytes, _sublane(b.dtype), g["step_bytes"])
    out2 = pl.pallas_call(
        _resize_kernel,
        out_shape=jax.ShapeDtypeStruct((nc, ht * wt), b.dtype),
        grid=(pl.cdiv(nc, tr),),
        in_specs=[
            _resident_spec((hi * wi, ht * wt)),
            pl.BlockSpec((tr, hi * wi), lambda i: (i, 0)),
        ],
        out_specs=pl.BlockSpec((tr, ht * wt), lambda i: (i, 0)),
        compiler_params=pltpu.CompilerParams(
            dimension_semantics=("parallel",),
            vmem_limit_bytes=g["vmem_limit"]),
        cost_estimate=pl.CostEstimate(
            flops=2 * nc * hi * wi * ht * wt,
            transcendentals=0,
            bytes_accessed=(b2.size + s.size + nc * ht * wt) * itemsize),
    )(s, b2)
    return out2.reshape(n, c, ht, wt)


def _pallas_dense_merge(tgt, src, ht, wt, resized_half):
    """Fused dense merge: output (N, 2C, ht, wt) where channel-half `resized_half`
    is nearest_resize(src) and the other half is tgt, written by ONE pallas_call
    (no separate concatenate / extra HBM round trip).  Requires C_tgt == C_src."""
    n, c = tgt.shape[:2]
    hi, wi = src.shape[-2:]
    out_dtype = jnp.result_type(tgt.dtype, src.dtype)
    tgt3 = tgt.reshape(n, c, ht * wt)
    src3 = src.reshape(n, c, hi * wi)
    s = _selection_matrix(hi, wi, ht, wt, src.dtype)
    g = _gen_constants()
    itemsize = jnp.dtype(out_dtype).itemsize
    row_bytes = (hi * wi + 2 * ht * wt) * itemsize
    trc = _pick_row_tile(c, row_bytes, _sublane(out_dtype), g["step_bytes"])
    out = pl.pallas_call(
        _make_dense_merge_kernel(resized_half),
        out_shape=jax.ShapeDtypeStruct((n, 2, c, ht * wt), out_dtype),
        grid=(n, pl.cdiv(c, trc), 2),
        in_specs=[
            _resident_spec((hi * wi, ht * wt)),
            # inputs are independent of the half axis -> fetched once, reused for both halves
            pl.BlockSpec((None, trc, ht * wt), lambda ni, ci, h: (ni, ci, 0)),
            pl.BlockSpec((None, trc, hi * wi), lambda ni, ci, h: (ni, ci, 0)),
        ],
        out_specs=pl.BlockSpec((None, None, trc, ht * wt),
                               lambda ni, ci, h: (ni, h, ci, 0)),
        compiler_params=pltpu.CompilerParams(
            dimension_semantics=("parallel", "parallel", "arbitrary"),
            vmem_limit_bytes=g["vmem_limit"]),
        cost_estimate=pl.CostEstimate(
            flops=2 * n * c * hi * wi * ht * wt,
            transcendentals=0,
            bytes_accessed=(tgt3.size + src3.size + s.size + n * 2 * c * ht * wt) * itemsize),
    )(s, tgt3, src3)
    # (N, 2, C, Ht*Wt) -> (N, 2C, Ht, Wt) is a free, contiguous reshape
    return out.reshape(n, 2 * c, ht, wt)


# ---------------------------------------------------------------------------
# Module-equivalent forward
# ---------------------------------------------------------------------------
def resize_merge(x, orig, *, mode="nearest", dense=False, resize_to="res"):
    """JAX/Pallas equivalent of ResizeMergeLayer.forward (x has shortcut `orig`)."""
    if mode != "nearest":
        # TODO(synk): only mode='nearest' interpolation is implemented in the kernels.
        raise NotImplementedError("only mode='nearest' is supported")

    if x.shape[-2:] == orig.shape[-2:]:
        if dense:
            # TODO(synk): dense concat with matching shapes is a pure layout op; left to XLA.
            return jnp.concatenate([x, orig], axis=1)
        assert x.shape == orig.shape, "add path needs matching N, C and spatial dims"
        n, c, h, w = x.shape
        out2 = _pallas_add(x.reshape(n * c, h * w), orig.reshape(n * c, h * w))
        return out2.reshape(n, c, h, w)

    # Mismatch: PyTorch F.interpolate(t, int_size) resizes to a SQUARE (size, size).
    src, tgt = (orig, x) if resize_to == "res" else (x, orig)
    th = tgt.shape[-2]
    tw = th
    g = _gen_constants()
    big_s = (src.shape[-2] * src.shape[-1] * th * tw
             * jnp.dtype(src.dtype).itemsize) > g["s_max"]

    if dense:
        fusable = (not big_s
                   and x.shape[0] == orig.shape[0]
                   and x.shape[1] == orig.shape[1]
                   and tgt.shape[-2:] == (th, tw))
        if fusable:
            # x-derived channels must come first in the concat.
            resized_half = 1 if resize_to == "res" else 0
            return _pallas_dense_merge(tgt, src, th, tw, resized_half)
        # Fallback: unequal channel counts (free-reshape fusion needs C_x == C_orig)
        # or selector too large for VMEM.
        if big_s:
            # TODO(synk): a separable H/W selector kernel would remove this plain-JAX fallback.
            resized = _jax_nearest(src, th, tw)
        else:
            resized = _pallas_resize(src, th, tw)
        pair = [x, resized] if resize_to == "res" else [resized, orig]
        assert pair[0].shape[-2:] == pair[1].shape[-2:], (
            "int-size nearest resize produces a square map; the other tensor must match")
        # TODO(synk): this fallback pays one extra HBM round trip for the concat.
        return jnp.concatenate(pair, axis=1)

    # dense=False: resize src onto tgt's (square) grid and add.
    assert tgt.shape[-2:] == (th, tw), (
        "resize target must be square (PyTorch int-size interpolate semantics)")
    assert tgt.shape[:2] == src.shape[:2], "N and C must match for the add"
    if big_s:
        # TODO(synk): selector too large for VMEM; plain-JAX nearest resize, Pallas add.
        resized = _jax_nearest(src, th, tw)
        n, c, h, w = tgt.shape
        out2 = _pallas_add(tgt.reshape(n * c, h * w), resized.reshape(n * c, h * w))
        return out2.reshape(n, c, h, w)
    return _pallas_resize_add(tgt, src, th, tw)


# ---------------------------------------------------------------------------
# Pure-JAX reference (PyTorch semantics) for verification
# ---------------------------------------------------------------------------
def _ref_resize_merge(x, orig, *, dense=False, resize_to="res"):
    if x.shape[-2:] != orig.shape[-2:]:
        if resize_to == "res":
            orig = _jax_nearest(orig, x.shape[-2], x.shape[-2])
        else:
            x = _jax_nearest(x, orig.shape[-2], orig.shape[-2])
    return jnp.concatenate([x, orig], axis=1) if dense else x + orig


if __name__ == "__main__":
    key = jax.random.PRNGKey(0)
    kx, ko, ky, kb = jax.random.split(key, 4)
    # result `x` at higher resolution, shortcut `orig` at lower resolution
    x = jax.random.normal(kx, (2, 4, 16, 16), dtype=jnp.float32)
    orig = jax.random.normal(ko, (2, 4, 8, 8), dtype=jnp.float32)
    y = jax.random.normal(ky, (2, 4, 16, 16), dtype=jnp.float32)

    # default: mode='nearest', dense=False, resize_to='res'  (resize shortcut up, add)
    out = jax.block_until_ready(resize_merge(x, orig))
    assert out.shape == (2, 4, 16, 16)
    assert jnp.allclose(out, _ref_resize_merge(x, orig), atol=1e-5, rtol=1e-5)

    # resize_to='orig' (resize result down, add)
    out_o = jax.block_until_ready(resize_merge(x, orig, resize_to="orig"))
    assert out_o.shape == (2, 4, 8, 8)
    assert jnp.allclose(out_o, _ref_resize_merge(x, orig, resize_to="orig"),
                        atol=1e-5, rtol=1e-5)

    # dense=True (fused resize + channel concat, equal channel counts)
    out_d = jax.block_until_ready(resize_merge(x, orig, dense=True))
    assert out_d.shape == (2, 8, 16, 16)
    assert jnp.allclose(out_d, _ref_resize_merge(x, orig, dense=True),
                        atol=1e-5, rtol=1e-5)

    # dense=True, resize_to='orig' (resized x first, passthrough orig second)
    out_do = jax.block_until_ready(resize_merge(x, orig, dense=True, resize_to="orig"))
    assert out_do.shape == (2, 8, 8, 8)
    assert jnp.allclose(out_do, _ref_resize_merge(x, orig, dense=True, resize_to="orig"),
                        atol=1e-5, rtol=1e-5)

    # dense=True with unequal channel counts -> non-fused fallback (resize kernel + concat)
    orig6 = jax.random.normal(kb, (2, 6, 8, 8), dtype=jnp.float32)
    out_u = jax.block_until_ready(resize_merge(x, orig6, dense=True))
    assert out_u.shape == (2, 10, 16, 16)
    assert jnp.allclose(out_u, _ref_resize_merge(x, orig6, dense=True),
                        atol=1e-5, rtol=1e-5)

    # identity path (spatial sizes already match): native-dtype add kernel
    out_i = jax.block_until_ready(resize_merge(x, y))
    assert jnp.allclose(out_i, x + y, atol=1e-5, rtol=1e-5)

    # bigger NC so the row grid actually has multiple pipelined steps
    xb = jax.random.normal(kx, (2, 64, 16, 16), dtype=jnp.float32)
    ob = jax.random.normal(ko, (2, 64, 8, 8), dtype=jnp.float32)
    out_b = jax.block_until_ready(resize_merge(xb, ob))
    assert jnp.allclose(out_b, _ref_resize_merge(xb, ob), atol=1e-5, rtol=1e-5)

    # bf16 path (exercises the 16-sublane tile rounding)
    xh = xb.astype(jnp.bfloat16)
    oh = ob.astype(jnp.bfloat16)
    out_h = jax.block_until_ready(resize_merge(xh, oh))
    assert out_h.dtype == jnp.bfloat16
    assert jnp.allclose(out_h.astype(jnp.float32),
                        _ref_resize_merge(xh, oh).astype(jnp.float32),
                        atol=2e-2, rtol=2e-2)

    print("KERNEL_OK")
</pallas_src>

<mosaic_0001>
module attributes {stable_mosaic.version = 11 : i64} {
  func.func @_resize_add_kernel(%arg0: i32, %arg1: memref<64x256xf32, #tpu.memory_space<vmem>>, %arg2: memref<8x64xf32, #tpu.memory_space<vmem>>, %arg3: memref<8x256xf32, #tpu.memory_space<vmem>>, %arg4: memref<8x256xf32, #tpu.memory_space<vmem>>) attributes {dimension_semantics = [#tpu.dimension_semantics<parallel>], iteration_bounds = array<i64: 1>, scalar_prefetch = 0 : i64, scratch_operands = 0 : i64, tpu.core_type = #tpu.core_type<tc>, window_params = [{pipeline_mode = #tpu.pipeline_mode<synchronous>, transform_indices = @transform_0, window_bounds = array<i64: 64, 256>}, {transform_indices = @transform_1, window_bounds = array<i64: 8, 64>}, {transform_indices = @transform_2, window_bounds = array<i64: 8, 256>}, {transform_indices = @transform_3, window_bounds = array<i64: 8, 256>}]} {
    %c0 = arith.constant 0 : index
    %c0_0 = arith.constant 0 : index
    %0 = vector.load %arg2[%c0, %c0_0] : memref<8x64xf32, #tpu.memory_space<vmem>>, vector<8x64xf32>
    %c0_1 = arith.constant 0 : index
    %c0_2 = arith.constant 0 : index
    %1 = vector.load %arg1[%c0_1, %c0_2] : memref<64x256xf32, #tpu.memory_space<vmem>>, vector<64x256xf32>
    %cst = arith.constant dense<0.000000e+00> : vector<8x256xf32>
    %2 = tpu.matmul %0, %1, %cst {dimension_numbers = #tpu.dot_dimension_numbers<[1], [0], [0], [1], [0, 0, 1, 1], [], []>} : vector<8x64xf32>, vector<64x256xf32>, vector<8x256xf32> -> vector<8x256xf32>
    %c0_3 = arith.constant 0 : index
    %c0_4 = arith.constant 0 : index
    %3 = vector.load %arg3[%c0_3, %c0_4] : memref<8x256xf32, #tpu.memory_space<vmem>>, vector<8x256xf32>
    %4 = arith.addf %3, %2 : vector<8x256xf32>
    %c0_5 = arith.constant 0 : index
    %c0_6 = arith.constant 0 : index
    %5 = vector.load %arg4[%c0_5, %c0_6] : memref<8x256xf32, #tpu.memory_space<vmem>>, vector<8x256xf32>
    tpu.vector_store %arg4[%c0_5, %c0_6], %4 {strides = array<i32>} : memref<8x256xf32, #tpu.memory_space<vmem>>, vector<8x256xf32>,
    return
  }
  func.func @transform_0(%arg0: i32) -> (i32, i32) {
    %c0_i32 = arith.constant 0 : i32
    %c0_i32_0 = arith.constant 0 : i32
    %c0_i32_1 = arith.constant 0 : i32
    return %c0_i32, %c0_i32_0 : i32, i32
  }
  func.func @transform_1(%arg0: i32) -> (i32, i32) {
    %c0_i32 = arith.constant 0 : i32
    %c0_i32_0 = arith.constant 0 : i32
    return %arg0, %c0_i32 : i32, i32
  }
  func.func @transform_2(%arg0: i32) -> (i32, i32) {
    %c0_i32 = arith.constant 0 : i32
    %c0_i32_0 = arith.constant 0 : i32
    return %arg0, %c0_i32 : i32, i32
  }
  func.func @transform_3(%arg0: i32) -> (i32, i32) {
    %c0_i32 = arith.constant 0 : i32
    %c0_i32_0 = arith.constant 0 : i32
    return %arg0, %c0_i32 : i32, i32
  }
}

</mosaic_0001>

<llo_original>
// kernel: tpu_custom_call.1
$region0: #{tpu_custom_call.1}
  #allocation0 [shape = 'u32[]', space=smem, size = 0x4, offset = 0x4, fixed_abs, tag = 'smem constant byte address 0x4 - core index']
  #allocation1 [shape = 'u32[144,128]{1,0:T(1,128)}', space=vmem, size = 0x12000, scoped, tag = 'internal scratch']
  %s0 = inlined_call_operand.hbm [shape: f32[64,256], index: 0, kind: input, shape index: {}]
  %s1 = inlined_call_operand.hbm [shape: f32[8,64], index: 1, kind: input, shape index: {}]
  %s2 = inlined_call_operand.hbm [shape: f32[8,256], index: 2, kind: input, shape index: {}]
  %s3 = inlined_call_operand.hbm [shape: f32[8,256], index: 3, kind: output, shape index: {}]
  %s4 = sld [smem:[#allocation0]]
  $region34: #{tpu_custom_call.1} parent=0
    _
  %s6 = ssub.s32 1, %s4
  %s7 = scalar_select 0, %s6, %s4
  $region1: #{tpu_custom_call.1} parent=0
    #allocation2 [shape = 'u8[65536]{0}', space=vmem, size = 0x10000, scoped, tag = 'input window, operand 0, single buffered']
    #allocation3 [shape = 's32[1]{0}', space=sflag, size = 0x4, scoped, tag = 'scoped memory for tpu_custom_call.1']
    #allocation4 [shape = 's32[1]{0}', space=sflag, size = 0x4, scoped, tag = 'scoped memory for tpu_custom_call.1']
    #allocation5 [shape = 'u8[4096]{0}', space=vmem, size = 0x1000, scoped, tag = 'input window, operand 1, single buffered']
    #allocation6 [shape = 's32[1]{0}', space=sflag, size = 0x4, scoped, tag = 'scoped memory for tpu_custom_call.1']
    #allocation7 [shape = 'u8[8192]{0}', space=vmem, size = 0x2000, scoped, tag = 'input window, operand 2, single buffered']
    #allocation8 [shape = 'u8[8192]{0}', space=vmem, size = 0x2000, scoped, tag = 'output window, operand 0, single buffered']
    %8 = vsyncpa [#allocation3], 0
    %9 = vsyncpa [#allocation6], 0
    %10 = vsyncpa [#allocation4], 0
    // Predicated region
    $region2: #{tpu_custom_call.1} parent=1 // pred_check
      _
    $region3: #{tpu_custom_call.1} parent=1 // pred_check_branch
      %12 = sbr.rel (0) target = $region5
    $region4: #{tpu_custom_call.1} parent=1 // pred_region
      %s14 = ssub.s32 2048, 2048
      %15 = vsyncadd [#allocation3], %s14
      %s16 = sshll.u32 [#allocation2], 4
      %s17 = int_to_ptr.vmem [resolvable:$true] %s16
      %22 = dma.hbm_to_vmem [thread:$0]  %s0, 2048, %s17, [#allocation3], 256, 256, 16
    $region5: #{tpu_custom_call.1} parent=1 // pred_fallthru
      _
    // Predicated region
    $region6: #{tpu_custom_call.1} parent=1 // pred_check
      _
    $region7: #{tpu_custom_call.1} parent=1 // pred_check_branch
      %24 = sbr.rel (0) target = $region9
    $region8: #{tpu_custom_call.1} parent=1 // pred_region
      %s26 = ssub.s32 128, 128
      %27 = vsyncadd [#allocation6], %s26
      %s29 = sshll.u32 [#allocation5], 4
      %s30 = int_to_ptr.vmem [resolvable:$true] %s29
      %32 = dma.hbm_to_vmem [thread:$0]  %s1, 128, %s30, [#allocation6]
    $region9: #{tpu_custom_call.1} parent=1 // pred_fallthru
      _
    // Predicated region
    $region10: #{tpu_custom_call.1} parent=1 // pred_check
      _
    $region11: #{tpu_custom_call.1} parent=1 // pred_check_branch
      %34 = sbr.rel (0) target = $region13
    $region12: #{tpu_custom_call.1} parent=1 // pred_region
      %s36 = ssub.s32 256, 256
      %37 = vsyncadd [#allocation6], %s36
      %s39 = sshll.u32 [#allocation7], 4
      %s40 = int_to_ptr.vmem [resolvable:$true] %s39
      %42 = dma.hbm_to_vmem [thread:$0]  %s2, 256, %s40, [#allocation6]
    $region13: #{tpu_custom_call.1} parent=1 // pred_fallthru
      _
    // Predicated region
    $region14: #{tpu_custom_call.1} parent=1 // pred_check
      _
    $region15: #{tpu_custom_call.1} parent=1 // pred_check_branch
      %44 = sbr.rel (0) target = $region17
    $region16: #{tpu_custom_call.1} parent=1 // pred_region
      %45 = dma.done [#allocation3], 2048
    $region17: #{tpu_custom_call.1} parent=1 // pred_fallthru
      _
    // Predicated region
    $region18: #{tpu_custom_call.1} parent=1 // pred_check
      _
    $region19: #{tpu_custom_call.1} parent=1 // pred_check_branch
      %47 = sbr.rel (0) target = $region21
    $region20: #{tpu_custom_call.1} parent=1 // pred_region
      %48 = dma.done [#allocation6], 128
    $region21: #{tpu_custom_call.1} parent=1 // pred_fallthru
      _
    // Predicated region
    $region22: #{tpu_custom_call.1} parent=1 // pred_check
      _
    $region23: #{tpu_custom_call.1} parent=1 // pred_check_branch
      %50 = sbr.rel (0) target = $region25
    $region24: #{tpu_custom_call.1} parent=1 // pred_region
      %51 = dma.done [#allocation6], 256
    $region25: #{tpu_custom_call.1} parent=1 // pred_fallthru
      _
    %v52 = vld [vmem:[#allocation5] sm:$0xff]
    %v53 = vld [vmem:[#allocation2] sm:$0xff]
    %v54 = vld [vmem:[#allocation2 + $0x8] sm:$0xff]
    %v55 = vld [vmem:[#allocation2 + $0x10] sm:$0xff]
    %v56 = vld [vmem:[#allocation2 + $0x18] sm:$0xff]
    %v57 = vld [vmem:[#allocation2 + $0x20] sm:$0xff]
    %v58 = vld [vmem:[#allocation2 + $0x28] sm:$0xff]
    %v59 = vld [vmem:[#allocation2 + $0x30] sm:$0xff]
    %v60 = vld [vmem:[#allocation2 + $0x38] sm:$0xff]
    %v61 = vld [vmem:[#allocation2 + $0x40] sm:$0xff]
    %v62 = vld [vmem:[#allocation2 + $0x48] sm:$0xff]
    %v63 = vld [vmem:[#allocation2 + $0x50] sm:$0xff]
    %v64 = vld [vmem:[#allocation2 + $0x58] sm:$0xff]
    %v65 = vld [vmem:[#allocation2 + $0x60] sm:$0xff]
    %v66 = vld [vmem:[#allocation2 + $0x68] sm:$0xff]
    %v67 = vld [vmem:[#allocation2 + $0x70] sm:$0xff]
    %v68 = vld [vmem:[#allocation2 + $0x78] sm:$0xff]
    %vm69 = vcmask 523264
    %v71 = vsel %vm69, %v52, 0
    %73 = vmatprep.subr.mxu0 0.0
    %74 = vmatpush1.msra.mxu0 0.0
    %75 = vmatprep.subr.mxu0 0.0
    %76 = vmatpush1.msra.mxu0 0.0
    %77 = vmatprep.subr.mxu0 0.0
    %78 = vmatpush1.msra.mxu0 0.0
    %79 = vmatprep.subr.mxu0 0.0
    %80 = vmatpush1.msra.mxu0 0.0
    %81 = vmatprep.subr.mxu0 0.0
    %82 = vmatpush1.msra.mxu0 0.0
    %83 = vmatprep.subr.mxu0 0.0
    %84 = vmatpush1.msra.mxu0 0.0
    %85 = vmatprep.subr.mxu0 0.0
    %86 = vmatpush1.msra.mxu0 0.0
    %87 = vmatprep.subr.mxu0 0.0
    %88 = vmatpush1.msra.mxu0 0.0
    %89 = vmatprep.subr.mxu0 %v68
    %90 = vmatpush1.msra.mxu0 %v67
    %91 = vmatprep.subr.mxu0 %v66
    %92 = vmatpush1.msra.mxu0 %v65
    %93 = vmatprep.subr.mxu0 %v64
    %94 = vmatpush1.msra.mxu0 %v63
    %95 = vmatprep.subr.mxu0 %v62
    %96 = vmatpush1.msra.mxu0 %v61
    %97 = vmatprep.subr.mxu0 %v60
    %98 = vmatpush1.msra.mxu0 %v59
    %99 = vmatprep.subr.mxu0 %v58
    %100 = vmatpush1.msra.mxu0 %v57
    %101 = vmatprep.subr.mxu0 %v56
    %102 = vmatpush1.msra.mxu0 %v55
    %103 = vmatprep.subr.mxu0 %v54
    %104 = vmatpush1.msra.mxu0 %v53
    %105 = vmatprep.subr.mxu0 0.0
    %106 = vmatpush2.msra.mxu0 0.0
    %107 = vmatprep.subr.mxu0 0.0
    %108 = vmatpush2.msra.mxu0 0.0
    %109 = vmatprep.subr.mxu0 0.0
    %110 = vmatpush2.msra.mxu0 0.0
    %111 = vmatprep.subr.mxu0 0.0
    %112 = vmatpush2.msra.mxu0 0.0
    %113 = vmatprep.subr.mxu0 0.0
    %114 = vmatpush2.msra.mxu0 0.0
    %115 = vmatprep.subr.mxu0 0.0
    %116 = vmatpush2.msra.mxu0 0.0
    %117 = vmatprep.subr.mxu0 0.0
    %118 = vmatpush2.msra.mxu0 0.0
    %119 = vmatprep.subr.mxu0 0.0
    %120 = vmatpush2.msra.mxu0 0.0
    %121 = vmatprep.subr.mxu0 0.0
    %122 = vmatpush2.msra.mxu0 0.0
    %123 = vmatprep.subr.mxu0 0.0
    %124 = vmatpush2.msra.mxu0 0.0
    %125 = vmatprep.subr.mxu0 0.0
    %126 = vmatpush2.msra.mxu0 0.0
    %127 = vmatprep.subr.mxu0 0.0
    %128 = vmatpush2.msra.mxu0 0.0
    %129 = vmatprep.subr.mxu0 0.0
    %130 = vmatpush2.msra.mxu0 0.0
    %131 = vmatprep.subr.mxu0 0.0
    %132 = vmatpush2.msra.mxu0 0.0
    %133 = vmatprep.subr.mxu0 0.0
    %134 = vmatpush2.msra.mxu0 0.0
    %135 = vmatprep.subr.mxu0 0.0
    %136 = vmatpush2.msra.mxu0 0.0
    %137 = vmatprep.mubr.f32.mxu0 0.0
    %138 = vmatmul.mubr.f32.gmra.mxu0 %v71
    %v139 = vpop.f32.mrf.mxu0
    %v140 = vadd.f32 0.0, %v139
    %v141 = vpop.f32.mrf.mxu0
    %v142 = vadd.f32 0.0, %v141
    %143 = vdwg.mxu0
    %v144 = vld [vmem:[#allocation7] sm:$0xff]
    %v145 = vld [vmem:[#allocation7 + $0x8] sm:$0xff]
    %v146 = vadd.f32 %v144, %v140
    %v147 = vadd.f32 %v145, %v142
    %148 = vst [vmem:[#allocation8] sm:$0xff] %v146
    %149 = vst [vmem:[#allocation8 + $0x8] sm:$0xff] %v147
    // Predicated region
    $region26: #{tpu_custom_call.1} parent=1 // pred_check
      _
    $region27: #{tpu_custom_call.1} parent=1 // pred_check_branch
      %151 = sbr.rel (0) target = $region29
    $region28: #{tpu_custom_call.1} parent=1 // pred_region
      %s153 = ssub.s32 256, 256
      %154 = vsyncadd [#allocation4], %s153
      %s156 = sshll.u32 [#allocation8], 4
      %s157 = int_to_ptr.vmem [resolvable:$true] %s156
      %159 = dma.vmem_to_hbm [thread:$0]  %s157, 256, %s3, [#allocation4]
    $region29: #{tpu_custom_call.1} parent=1 // pred_fallthru
      _
    // Predicated region
    $region30: #{tpu_custom_call.1} parent=1 // pred_check
      _
    $region31: #{tpu_custom_call.1} parent=1 // pred_check_branch
      %161 = sbr.rel (0) target = $region33
    $region32: #{tpu_custom_call.1} parent=1 // pred_region
      %162 = dma.done [#allocation4], 256
    $region33: #{tpu_custom_call.1} parent=1 // pred_fallthru
      _
    %163 = vsyncpa [#allocation3], 1
    %164 = vsyncpa [#allocation6], 1
    %165 = vsyncpa [#allocation4], 1

</llo_original>
